<compile_context>
chip_gen: v5e
topology: v5e:2x2
jax: 0.10.0
libtpu: 0.0.40
codegen_flags: <defaults>
</compile_context>

<pallas_src>
import functools

import jax
import jax.numpy as jnp
from jax import lax
from jax.experimental import pallas as pl
from jax.experimental.pallas import tpu as pltpu

LANES = 128
SUBLANES = 8
ALIGN = SUBLANES * LANES          # 1024-element reshape granularity
MAX_BLOCK_ROWS = 2048             # (2048, 128) f32 tile = 1 MiB per input buffer
NUM_SPLITS_MAX = 2                # megacore split (v7x has 2 TCs; no-op elsewhere)
SMOOTH = 1e-05


def _dice_kernel(x_ref, t_ref, out_ref, *, block_rows, inner_blocks,
                 n_valid, needs_mask):
    """Accumulates [sum(s*t), sum(s), sum(t)] partials into a (3,8,128) slab."""
    c = pl.program_id(0)   # "parallel" split axis (one per TensorCore on v7x)
    i = pl.program_id(1)   # "arbitrary" sequential reduction axis

    @pl.when(i == 0)
    def _():
        out_ref[...] = jnp.zeros_like(out_ref)

    # Stream in native dtype, upcast in-register.
    x = x_ref[...].astype(jnp.float32)
    t = t_ref[...].astype(jnp.float32)
    s = jax.nn.sigmoid(x)

    if needs_mask:
        # Mask (a) the tail of the last valid block and (b) undefined data in
        # partial / duplicated overhang blocks, keyed to the *logical* element
        # index.  jnp.where (a select) keeps NaN/garbage from leaking.
        logical_block = c * inner_blocks + i
        base = logical_block * (block_rows * LANES)
        row_ids = lax.broadcasted_iota(jnp.int32, (block_rows, LANES), 0)
        lane_ids = lax.broadcasted_iota(jnp.int32, (block_rows, LANES), 1)
        idx = base + row_ids * LANES + lane_ids
        mask = idx < n_valid
        s = jnp.where(mask, s, 0.0)
        t = jnp.where(mask, t, 0.0)

    st = s * t

    # Fold the (block_rows, 128) tile down to a vreg-shaped (8, 128) partial
    # with pure VPU adds; the cross-lane/sublane reduce happens once, outside
    # the kernel, on a tiny array.
    k = block_rows // SUBLANES

    def fold(v):
        return jnp.sum(v.reshape(k, SUBLANES, LANES), axis=0)

    out_ref[0, 0] += fold(st)   # intersection partial
    out_ref[0, 1] += fold(s)    # sum(sigmoid(input)) partial
    out_ref[0, 2] += fold(t)    # sum(target) partial


@jax.jit
def dice_loss(inputs, targets):
    # Keep native dtypes; the kernel upcasts to f32 internally.
    x = jnp.ravel(inputs)
    t = jnp.ravel(targets)
    n = x.shape[0]

    # Pad only when required to make the (rows, 128) reshape legal; padded
    # elements are masked out in-kernel, so the pad value is irrelevant.
    padded = ((n + ALIGN - 1) // ALIGN) * ALIGN
    if padded != n:
        x = jnp.pad(x, (0, padded - n))
        t = jnp.pad(t, (0, padded - n))

    rows = padded // LANES                      # always a multiple of 8
    x2 = x.reshape(rows, LANES)
    t2 = t.reshape(rows, LANES)

    block_rows = min(MAX_BLOCK_ROWS, rows)      # multiple of 8 by construction
    total_blocks = -(-rows // block_rows)
    num_splits = min(NUM_SPLITS_MAX, total_blocks)
    inner_blocks = -(-total_blocks // num_splits)
    cover = num_splits * inner_blocks * block_rows * LANES
    needs_mask = cover != n

    def in_map(c, i):
        # Clamp so overhanging blocks never address past the last block; their
        # (masked) contribution is zero anyway.
        return (jnp.minimum(c * inner_blocks + i, total_blocks - 1), 0)

    kernel = functools.partial(
        _dice_kernel,
        block_rows=block_rows,
        inner_blocks=inner_blocks,
        n_valid=n,
        needs_mask=needs_mask,
    )

    out_bytes = num_splits * 3 * SUBLANES * LANES * 4
    partials = pl.pallas_call(
        kernel,
        out_shape=jax.ShapeDtypeStruct(
            (num_splits, 3, SUBLANES, LANES), jnp.float32
        ),
        grid_spec=pltpu.PrefetchScalarGridSpec(
            num_scalar_prefetch=0,
            grid=(num_splits, inner_blocks),
            in_specs=[
                # Default double-buffering; pipeline_mode=pl.Buffered(3) is an
                # optional v6e tune if traces still show exposed DMA.
                pl.BlockSpec((block_rows, LANES), in_map),
                pl.BlockSpec((block_rows, LANES), in_map),
            ],
            out_specs=pl.BlockSpec(
                (1, 3, SUBLANES, LANES), lambda c, i: (c, 0, 0, 0)
            ),
        ),
        compiler_params=pltpu.CompilerParams(
            dimension_semantics=("parallel", "arbitrary"),
        ),
        cost_estimate=pl.CostEstimate(
            flops=6 * n,
            transcendentals=n,
            bytes_accessed=x2.size * x2.dtype.itemsize
            + t2.size * t2.dtype.itemsize
            + out_bytes,
        ),
    )(x2, t2)

    # Tiny final reduction + dice formula in plain JAX (a few scalars).
    inter = jnp.sum(partials[:, 0])
    s_sum = jnp.sum(partials[:, 1])
    t_sum = jnp.sum(partials[:, 2])
    dice = (2.0 * inter + SMOOTH) / (s_sum + t_sum + SMOOTH)
    return 1.0 - dice


def _reference(inputs, targets):
    x = jnp.ravel(inputs).astype(jnp.float32)
    t = jnp.ravel(targets).astype(jnp.float32)
    s = jax.nn.sigmoid(x)
    inter = jnp.sum(s * t)
    dice = (2.0 * inter + SMOOTH) / (jnp.sum(s) + jnp.sum(t) + SMOOTH)
    return 1.0 - dice


if __name__ == "__main__":
    key = jax.random.PRNGKey(0)
    k1, k2, k3, k4, k5, k6 = jax.random.split(key, 6)

    # Primary case: small NCHW logits / mask, fully aligned path.
    x = jax.random.normal(k1, (2, 4, 16, 16), dtype=jnp.float32)
    tgt = (jax.random.uniform(k2, (2, 4, 16, 16)) > 0.5).astype(jnp.float32)
    loss = dice_loss(x, tgt)
    jax.block_until_ready(loss)
    ref = _reference(x, tgt)
    assert jnp.allclose(loss, ref, rtol=1e-5, atol=1e-6), (loss, ref)

    # Non-aligned element count: exercises the in-kernel tail mask.
    x2 = jax.random.normal(k3, (2, 3, 17, 19), dtype=jnp.float32)
    t2 = (jax.random.uniform(k4, (2, 3, 17, 19)) > 0.5).astype(jnp.float32)
    loss2 = dice_loss(x2, t2)
    jax.block_until_ready(loss2)
    ref2 = _reference(x2, t2)
    assert jnp.allclose(loss2, ref2, rtol=1e-5, atol=1e-6), (loss2, ref2)

    # Larger tensor: exercises multi-block streaming, the 2-way core split,
    # and a partial boundary block handled by the mask.
    x3 = jax.random.normal(k5, (4, 16, 80, 80), dtype=jnp.float32)
    t3 = (jax.random.uniform(k6, (4, 16, 80, 80)) > 0.5).astype(jnp.float32)
    loss3 = dice_loss(x3, t3)
    jax.block_until_ready(loss3)
    ref3 = _reference(x3, t3)
    assert jnp.allclose(loss3, ref3, rtol=1e-4, atol=1e-5), (loss3, ref3)

    print("KERNEL_OK")
</pallas_src>

<mosaic_0001>
module attributes {stable_mosaic.version = 11 : i64} {
  func.func @_dice_kernel(%arg0: i32, %arg1: i32, %arg2: memref<16x128xf32, #tpu.memory_space<vmem>>, %arg3: memref<16x128xf32, #tpu.memory_space<vmem>>, %arg4: memref<1x3x8x128xf32, #tpu.memory_space<vmem>>) attributes {dimension_semantics = [#tpu.dimension_semantics<parallel>, #tpu.dimension_semantics<arbitrary>], iteration_bounds = array<i64: 1, 1>, scalar_prefetch = 0 : i64, scratch_operands = 0 : i64, tpu.core_type = #tpu.core_type<tc>, window_params = [{transform_indices = @transform_0, window_bounds = array<i64: 16, 128>}, {transform_indices = @transform_1, window_bounds = array<i64: 16, 128>}, {transform_indices = @transform_2, window_bounds = array<i64: 1, 3, 8, 128>}]} {
    %c0_i32 = arith.constant 0 : i32
    %0 = arith.cmpi eq, %arg1, %c0_i32 : i32
    %1 = arith.extui %0 : i1 to i32
    %c0_i32_0 = arith.constant 0 : i32
    %2 = arith.cmpi ne, %1, %c0_i32_0 : i32
    scf.if %2 {
      %cst_29 = arith.constant 0.000000e+00 : f32
      %35 = vector.broadcast %cst_29 : f32 to vector<1x3x8x128xf32>
      %c0_30 = arith.constant 0 : index
      %c0_31 = arith.constant 0 : index
      %c0_32 = arith.constant 0 : index
      %c0_33 = arith.constant 0 : index
      %36 = vector.load %arg4[%c0_30, %c0_31, %c0_32, %c0_33] : memref<1x3x8x128xf32, #tpu.memory_space<vmem>>, vector<1x3x8x128xf32>
      tpu.vector_store %arg4[%c0_30, %c0_31, %c0_32, %c0_33], %35 {strides = array<i32>} : memref<1x3x8x128xf32, #tpu.memory_space<vmem>>, vector<1x3x8x128xf32>,
    } else {
    }
    %c0 = arith.constant 0 : index
    %c0_1 = arith.constant 0 : index
    %3 = vector.load %arg2[%c0, %c0_1] : memref<16x128xf32, #tpu.memory_space<vmem>>, vector<16x128xf32>
    %c0_2 = arith.constant 0 : index
    %c0_3 = arith.constant 0 : index
    %4 = vector.load %arg3[%c0_2, %c0_3] : memref<16x128xf32, #tpu.memory_space<vmem>>, vector<16x128xf32>
    %5 = arith.negf %3 : vector<16x128xf32>
    %6 = math.exp %5 : vector<16x128xf32>
    %cst = arith.constant 1.000000e+00 : f32
    %7 = vector.broadcast %cst : f32 to vector<16x128xf32>
    %8 = arith.addf %7, %6 : vector<16x128xf32>
    %9 = arith.divf %7, %8 : vector<16x128xf32>
    %10 = arith.mulf %9, %4 : vector<16x128xf32>
    %c0_4 = arith.constant 0 : index
    %c0_5 = arith.constant 0 : index
    %c0_6 = arith.constant 0 : index
    %c0_7 = arith.constant 0 : index
    %11 = vector.load %arg4[%c0_4, %c0_5, %c0_6, %c0_7] : memref<1x3x8x128xf32, #tpu.memory_space<vmem>>, vector<1x1x8x128xf32>
    %12 = vector.shape_cast %11 : vector<1x1x8x128xf32> to vector<8x128xf32>
    %13 = vector.shape_cast %10 : vector<16x128xf32> to vector<2x8x128xf32>
    %cst_8 = arith.constant dense<0.000000e+00> : vector<8x128xf32>
    %14 = vector.multi_reduction <add>, %13, %cst_8 [0] : vector<2x8x128xf32> to vector<8x128xf32>
    %15 = arith.addf %12, %14 : vector<8x128xf32>
    %c0_9 = arith.constant 0 : index
    %c0_10 = arith.constant 0 : index
    %c0_11 = arith.constant 0 : index
    %c0_12 = arith.constant 0 : index
    %16 = vector.load %arg4[%c0_9, %c0_10, %c0_11, %c0_12] : memref<1x3x8x128xf32, #tpu.memory_space<vmem>>, vector<1x1x8x128xf32>
    %17 = vector.shape_cast %16 : vector<1x1x8x128xf32> to vector<8x128xf32>
    %18 = vector.shape_cast %15 : vector<8x128xf32> to vector<1x1x8x128xf32>
    tpu.vector_store %arg4[%c0_9, %c0_10, %c0_11, %c0_12], %18 {strides = array<i32>} : memref<1x3x8x128xf32, #tpu.memory_space<vmem>>, vector<1x1x8x128xf32>,
    %c0_13 = arith.constant 0 : index
    %c1 = arith.constant 1 : index
    %c0_14 = arith.constant 0 : index
    %c0_15 = arith.constant 0 : index
    %19 = vector.load %arg4[%c0_13, %c1, %c0_14, %c0_15] : memref<1x3x8x128xf32, #tpu.memory_space<vmem>>, vector<1x1x8x128xf32>
    %20 = vector.shape_cast %19 : vector<1x1x8x128xf32> to vector<8x128xf32>
    %21 = vector.shape_cast %9 : vector<16x128xf32> to vector<2x8x128xf32>
    %cst_16 = arith.constant dense<0.000000e+00> : vector<8x128xf32>
    %22 = vector.multi_reduction <add>, %21, %cst_16 [0] : vector<2x8x128xf32> to vector<8x128xf32>
    %23 = arith.addf %20, %22 : vector<8x128xf32>
    %c0_17 = arith.constant 0 : index
    %c1_18 = arith.constant 1 : index
    %c0_19 = arith.constant 0 : index
    %c0_20 = arith.constant 0 : index
    %24 = vector.load %arg4[%c0_17, %c1_18, %c0_19, %c0_20] : memref<1x3x8x128xf32, #tpu.memory_space<vmem>>, vector<1x1x8x128xf32>
    %25 = vector.shape_cast %24 : vector<1x1x8x128xf32> to vector<8x128xf32>
    %26 = vector.shape_cast %23 : vector<8x128xf32> to vector<1x1x8x128xf32>
    tpu.vector_store %arg4[%c0_17, %c1_18, %c0_19, %c0_20], %26 {strides = array<i32>} : memref<1x3x8x128xf32, #tpu.memory_space<vmem>>, vector<1x1x8x128xf32>,
    %c0_21 = arith.constant 0 : index
    %c2 = arith.constant 2 : index
    %c0_22 = arith.constant 0 : index
    %c0_23 = arith.constant 0 : index
    %27 = vector.load %arg4[%c0_21, %c2, %c0_22, %c0_23] : memref<1x3x8x128xf32, #tpu.memory_space<vmem>>, vector<1x1x8x128xf32>
    %28 = vector.shape_cast %27 : vector<1x1x8x128xf32> to vector<8x128xf32>
    %29 = vector.shape_cast %4 : vector<16x128xf32> to vector<2x8x128xf32>
    %cst_24 = arith.constant dense<0.000000e+00> : vector<8x128xf32>
    %30 = vector.multi_reduction <add>, %29, %cst_24 [0] : vector<2x8x128xf32> to vector<8x128xf32>
    %31 = arith.addf %28, %30 : vector<8x128xf32>
    %c0_25 = arith.constant 0 : index
    %c2_26 = arith.constant 2 : index
    %c0_27 = arith.constant 0 : index
    %c0_28 = arith.constant 0 : index
    %32 = vector.load %arg4[%c0_25, %c2_26, %c0_27, %c0_28] : memref<1x3x8x128xf32, #tpu.memory_space<vmem>>, vector<1x1x8x128xf32>
    %33 = vector.shape_cast %32 : vector<1x1x8x128xf32> to vector<8x128xf32>
    %34 = vector.shape_cast %31 : vector<8x128xf32> to vector<1x1x8x128xf32>
    tpu.vector_store %arg4[%c0_25, %c2_26, %c0_27, %c0_28], %34 {strides = array<i32>} : memref<1x3x8x128xf32, #tpu.memory_space<vmem>>, vector<1x1x8x128xf32>,
    return
  }
  func.func @transform_0(%arg0: i32, %arg1: i32) -> (i32, i32) {
    %c1_i32 = arith.constant 1 : i32
    %0 = arith.muli %arg0, %c1_i32 : i32
    %1 = arith.addi %0, %arg1 : i32
    %c0_i32 = arith.constant 0 : i32
    %2 = arith.minsi %1, %c0_i32 : i32
    %c0_i32_0 = arith.constant 0 : i32
    %c0_i32_1 = arith.constant 0 : i32
    return %2, %c0_i32_0 : i32, i32
  }
  func.func @transform_1(%arg0: i32, %arg1: i32) -> (i32, i32) {
    %c1_i32 = arith.constant 1 : i32
    %0 = arith.muli %arg0, %c1_i32 : i32
    %1 = arith.addi %0, %arg1 : i32
    %c0_i32 = arith.constant 0 : i32
    %2 = arith.minsi %1, %c0_i32 : i32
    %c0_i32_0 = arith.constant 0 : i32
    %c0_i32_1 = arith.constant 0 : i32
    return %2, %c0_i32_0 : i32, i32
  }
  func.func @transform_2(%arg0: i32, %arg1: i32) -> (i32, i32, i32, i32) {
    %c0_i32 = arith.constant 0 : i32
    %c0_i32_0 = arith.constant 0 : i32
    %c0_i32_1 = arith.constant 0 : i32
    %c0_i32_2 = arith.constant 0 : i32
    return %arg0, %c0_i32, %c0_i32_0, %c0_i32_1 : i32, i32, i32, i32
  }
}

</mosaic_0001>

<llo_original>
// kernel: dice_loss.1
$region0: #{dice_loss.1}
  #allocation0 [shape = 'u32[]', space=smem, size = 0x4, offset = 0x4, fixed_abs, tag = 'smem constant byte address 0x4 - core index']
  #allocation1 [shape = 'u32[72,128]{1,0:T(1,128)}', space=vmem, size = 0x9000, scoped, tag = 'internal scratch']
  %s0 = inlined_call_operand.vmem [shape: f32[16,128], index: 0, kind: input, shape index: {}]
  %s1 = inlined_call_operand.vmem [shape: f32[16,128], index: 1, kind: input, shape index: {}]
  %s2 = inlined_call_operand.vmem [shape: f32[1,3,8,128], index: 2, kind: output, shape index: {}]
  %s3 = sld [smem:[#allocation0]]
  $region22: #{dice_loss.1} parent=0
    _
  %s5 = ssub.s32 1, %s3
  %s6 = scalar_select 0, %s5, %s3
  // Predicated region
  $region2: #{dice_loss.1} parent=0 // pred_check
    _
  $region3: #{dice_loss.1} parent=0 // pred_check_branch
    %8 = sbr.rel (0) target = $region5
  $region4: #{dice_loss.1} parent=0 // pred_region
    %s9 = sadd.s32 0, 0
    %p10 = scmp.lt.s32.totalorder %s9, 0
    %s11 = scalar_select %p10, %s9, 0
    %s12 = smul.u32 2, %s11
    %p13 = scmp.lt.s32.totalorder %s12, 1
    %s14 = scalar_select %p13, %s12, 1
    %s15 = smul.addr %s14, 8
    %s16 = scalar_lea.vmem %s0, %s15
    %s17 = sadd.s32 0, 0
    %p18 = scmp.lt.s32.totalorder %s17, 0
    %s19 = scalar_select %p18, %s17, 0
    %s20 = smul.u32 2, %s19
  $region5: #{dice_loss.1} parent=0 // pred_fallthru
    _
  // Predicated region
  $region6: #{dice_loss.1} parent=0 // pred_check
    _
  $region7: #{dice_loss.1} parent=0 // pred_check_branch
    %22 = sbr.rel (0) target = $region9
  $region8: #{dice_loss.1} parent=0 // pred_region
    %s23 = sadd.s32 0, 0
    %p24 = scmp.lt.s32.totalorder %s23, 0
    %s25 = scalar_select %p24, %s23, 0
    %s26 = smul.u32 2, %s25
    %p27 = scmp.lt.s32.totalorder %s26, 1
    %s28 = scalar_select %p27, %s26, 1
    %s29 = smul.addr %s28, 8
    %s30 = scalar_lea.vmem %s1, %s29
    %s31 = sadd.s32 0, 0
    %p32 = scmp.lt.s32.totalorder %s31, 0
    %s33 = scalar_select %p32, %s31, 0
    %s34 = smul.u32 2, %s33
  $region9: #{dice_loss.1} parent=0 // pred_fallthru
    _
  %s35 = sadd.s32 0, 0
  %p36 = scmp.lt.s32.totalorder %s35, 0
  %s37 = scalar_select %p36, %s35, 0
  %s38 = smul.u32 2, %s37
  %p39 = scmp.lt.s32.totalorder %s38, 1
  %s40 = scalar_select %p39, %s38, 1
  %s41 = smul.addr %s40, 8
  %s42 = scalar_lea.vmem %s0, %s41
  %s43 = sadd.s32 0, 0
  %p44 = scmp.lt.s32.totalorder %s43, 0
  %s45 = scalar_select %p44, %s43, 0
  %s46 = smul.u32 2, %s45
  %p47 = scmp.lt.s32.totalorder %s46, 1
  %s48 = scalar_select %p47, %s46, 1
  %s49 = smul.addr %s48, 8
  %s50 = scalar_lea.vmem %s1, %s49
  %s51 = sadd.s32 0, 0
  %p52 = scmp.lt.s32.totalorder %s51, 0
  %s53 = scalar_select %p52, %s51, 0
  %s54 = smul.u32 2, %s53
  %p55 = scmp.lt.s32.totalorder %s54, 1
  %s56 = scalar_select %p55, %s54, 1
  %s57 = smul.addr %s56, 8
  %s58 = scalar_lea.vmem %s0, %s57
  %s59 = sadd.s32 0, 0
  %p60 = scmp.lt.s32.totalorder %s59, 0
  %s61 = scalar_select %p60, %s59, 0
  %s62 = smul.u32 2, %s61
  %s63 = sadd.s32 0, 0
  %p64 = scmp.lt.s32.totalorder %s63, 0
  %s65 = scalar_select %p64, %s63, 0
  %s66 = smul.u32 2, %s65
  %p67 = scmp.lt.s32.totalorder %s66, 1
  %s68 = scalar_select %p67, %s66, 1
  %s69 = smul.addr %s68, 8
  %s70 = scalar_lea.vmem %s1, %s69
  %s71 = sadd.s32 0, 0
  %p72 = scmp.lt.s32.totalorder %s71, 0
  %s73 = scalar_select %p72, %s71, 0
  %s74 = smul.u32 2, %s73
  %p75 = scmp.eq.s32.totalorder 0, 0
  // Predicated region
  $region10: #{dice_loss.1} parent=0 // pred_check
    %p76 = pneg %p75
  $region11: #{dice_loss.1} parent=0 // pred_check_branch
    %78 = sbr.rel (%p76) target = $region13
  $region12: #{dice_loss.1} parent=0 // pred_region
    %79 = vst [vmem:[%s2] sm:$0xff] 0.0
    %80 = vst [vmem:[%s2 + $0x8] sm:$0xff] 0.0
    %81 = vst [vmem:[%s2 + $0x10] sm:$0xff] 0.0
  $region13: #{dice_loss.1} parent=0 // pred_fallthru
    _
  %v82 = vld [vmem:[%s58] sm:$0xff]
  %v83 = vld [vmem:[%s58 + $0x8] sm:$0xff]
  %v84 = vld [vmem:[%s70] sm:$0xff]
  %v85 = vld [vmem:[%s70 + $0x8] sm:$0xff]
  %v86 = vxor.u32 %v82, 2147483648
  %v87 = vxor.u32 %v83, 2147483648
  %v88 = vmul.f32 %v86, 1.442695
  %v89 = vpow.pop %v88
  %v90 = vmul.f32 %v87, 1.442695
  %v91 = vpow.pop %v90
  %v92 = vadd.f32 %v89, 1.0
  %v93 = vadd.f32 %v91, 1.0
  %v94 = vrcp.pop %v92
  %v95 = vmul.f32 %v92, %v94
  %v96 = vsub.f32 1.0, %v95
  %v97 = vmul.f32 %v94, %v96
  %v98 = vadd.f32 %v94, %v97
  %vm99 = vweird.f32 %v92
  %vm100 = vweird.f32 %v94
  %vm101 = vmor %vm99, %vm100
  %v102 = vsel %vm101, %v94, %v98
  %v103 = vand.u32 2147483647, %v92
  %vm104 = vcmp.eq.f32.partialorder %v103, 8.507059e+37
  %v105 = vand.u32 %v92, 2147483648
  %v106 = vor.u32 1.1754944e-38, %v105
  %v107 = vsel %vm104, %v106, %v102
  %v108 = vmul.f32 1.0, %v107
  %v109 = vrcp.pop %v93
  %v110 = vmul.f32 %v93, %v109
  %v111 = vsub.f32 1.0, %v110
  %v112 = vmul.f32 %v109, %v111
  %v113 = vadd.f32 %v109, %v112
  %vm114 = vweird.f32 %v93
  %vm115 = vweird.f32 %v109
  %vm116 = vmor %vm114, %vm115
  %v117 = vsel %vm116, %v109, %v113
  %v118 = vand.u32 2147483647, %v93
  %vm119 = vcmp.eq.f32.partialorder %v118, 8.507059e+37
  %v120 = vand.u32 %v93, 2147483648
  %v121 = vor.u32 1.1754944e-38, %v120
  %v122 = vsel %vm119, %v121, %v117
  %v123 = vmul.f32 1.0, %v122
  %v124 = vmul.f32 %v108, %v84
  %v125 = vmul.f32 %v123, %v85
  %v126 = vld [vmem:[%s2] sm:$0xff]
  %v127 = vadd.f32 %v124, %v125
  %v128 = vadd.f32 %v126, %v127
  %129 = vst [vmem:[%s2] sm:$0xff] %v128
  %s130 = scalar_lea.vmem %s2, 8
  %v131 = vld [vmem:[%s130] sm:$0xff]
  %v132 = vadd.f32 %v108, %v123
  %v133 = vadd.f32 %v131, %v132
  %134 = vst [vmem:[%s130] sm:$0xff] %v133
  %s135 = scalar_lea.vmem %s2, 16
  %v136 = vld [vmem:[%s135] sm:$0xff]
  %v137 = vadd.f32 %v84, %v85
  %v138 = vadd.f32 %v136, %v137
  %139 = vst [vmem:[%s135] sm:$0xff] %v138
  // Predicated region
  $region14: #{dice_loss.1} parent=0 // pred_check
    _
  $region15: #{dice_loss.1} parent=0 // pred_check_branch
    %141 = sbr.rel (0) target = $region17
  $region16: #{dice_loss.1} parent=0 // pred_region
    _
  $region17: #{dice_loss.1} parent=0 // pred_fallthru
    _
  // Predicated region
  $region18: #{dice_loss.1} parent=0 // pred_check
    _
  $region19: #{dice_loss.1} parent=0 // pred_check_branch
    %143 = sbr.rel (0) target = $region21
  $region20: #{dice_loss.1} parent=0 // pred_region
    _
  $region21: #{dice_loss.1} parent=0 // pred_fallthru
    _

</llo_original>
